<compile_context>
chip_gen: v5e
topology: v5e:2x2
jax: 0.10.0
libtpu: 0.0.40
codegen_flags: <defaults>
</compile_context>

<pallas_src>
import functools

import jax
import jax.numpy as jnp
from jax.experimental import pallas as pl
from jax.experimental.pallas import tpu as pltpu


def _linear_attention_kernel(x_ref, wqkv_ref, wout_ref, bias_ref, gamma_ref,
                             beta_ref, o_ref, *, dim_keys, n_heads, scale,
                             eps, compute_dtype):
    """One batch element per grid step.

    x_ref:     (1, c, seq)        input tokens, channel-major / lane = seq
    wqkv_ref:  (3*hidden, c)      fused QKV 1x1-conv weight
    wout_ref:  (c, hidden)        output 1x1-conv weight
    bias_ref:  (c, 1)             output conv bias
    gamma_ref: (c, 1)             GroupNorm(1, c) weight
    beta_ref:  (c, 1)             GroupNorm(1, c) bias
    o_ref:     (1, c, seq)        output (lane-dense: seq on lanes)
    """
    cdt = compute_dtype
    hidden = dim_keys * n_heads

    x = x_ref[0]                                                   # (c, seq)

    # Fused QKV projection for all heads in one MXU call, f32 accumulation.
    qkv = jnp.dot(wqkv_ref[...], x,
                  preferred_element_type=jnp.float32)              # (3*hidden, seq)

    head_res = []
    for h in range(n_heads):                                       # static unroll
        d0 = h * dim_keys
        q = qkv[d0:d0 + dim_keys, :]                               # (dk, seq) f32
        k = qkv[hidden + d0:hidden + d0 + dim_keys, :]
        v = qkv[2 * hidden + d0:2 * hidden + d0 + dim_keys, :]

        # softmax over the key dimension d (sublane axis) for q
        q = jnp.exp(q - jnp.max(q, axis=0, keepdims=True))
        q = q * pl.reciprocal(jnp.sum(q, axis=0, keepdims=True), approx=True)

        # softmax over the token dimension n (lane axis) for k
        k = jnp.exp(k - jnp.max(k, axis=1, keepdims=True))
        k = k * pl.reciprocal(jnp.sum(k, axis=1, keepdims=True), approx=True)

        # context^T[e, d] = sum_n v[e, n] * k[d, n]   (A @ B^T form, no transpose)
        ctx_t = jax.lax.dot_general(
            v.astype(cdt), k.astype(cdt),
            (((1,), (1,)), ((), ())),
            preferred_element_type=jnp.float32)                    # (dk, dk)

        # scale (belongs on softmaxed q) folded into the tiny (dk, dk) context.
        ctx_t = ctx_t * scale

        # res[e, n] = sum_d context[d, e] * q[d, n]  ==  ctx_t @ q
        res = jnp.dot(ctx_t.astype(cdt), q.astype(cdt),
                      preferred_element_type=jnp.float32)          # (dk, seq)
        head_res.append(res)

    res_full = (jnp.concatenate(head_res, axis=0)
                if n_heads > 1 else head_res[0])                   # (hidden, seq)

    # Output 1x1 conv: single (c, hidden) @ (hidden, seq) matmul + bias.
    out0 = jnp.dot(wout_ref[...], res_full.astype(cdt),
                   preferred_element_type=jnp.float32)             # (c, seq)
    out0 = out0 + bias_ref[...]

    # GroupNorm(num_groups=1): normalise over all (c, seq) elements, f32 stats.
    mu = jnp.mean(out0, keepdims=True)                             # (1, 1)
    xc = out0 - mu
    var = jnp.mean(xc * xc, keepdims=True)
    y = xc * jax.lax.rsqrt(var + eps)
    y = y * gamma_ref[...] + beta_ref[...]

    o_ref[0] = y.astype(o_ref.dtype)                               # lane-dense store


def linear_attention_forward(x, w_qkv, w_out, b_out, gn_gamma, gn_beta, *,
                             dim_keys, n_heads, eps=1e-5,
                             compute_dtype=jnp.float32):
    """x: (b, c, H, W) float32 NCHW.  Returns (b, c, H, W) float32.

    compute_dtype: dtype fed to the MXU (jnp.bfloat16 recommended on v6e/v7x);
    softmax / accumulation / GroupNorm remain float32.
    """
    b, c, H, W = x.shape
    seq = H * W
    hidden = dim_keys * n_heads
    scale = dim_keys ** (-0.5)

    # --- parameter / input prep: pure reshapes, no activation transposes -----
    wqkv2 = w_qkv.reshape(3 * hidden, c).astype(compute_dtype)
    wout2 = w_out.reshape(c, hidden).astype(compute_dtype)
    bias_col = b_out.reshape(c, 1).astype(jnp.float32)
    gamma_col = gn_gamma.reshape(c, 1).astype(jnp.float32)
    beta_col = gn_beta.reshape(c, 1).astype(jnp.float32)

    x_seq = x.reshape(b, c, seq).astype(compute_dtype)   # natural NCHW flatten

    kernel = functools.partial(
        _linear_attention_kernel,
        dim_keys=dim_keys, n_heads=n_heads, scale=scale, eps=eps,
        compute_dtype=compute_dtype)

    # Advisory cost estimate for the XLA scheduler.
    itemsize = jnp.dtype(compute_dtype).itemsize
    flops = 2 * b * seq * (3 * hidden * c
                           + 2 * n_heads * dim_keys * dim_keys
                           + c * hidden)
    transcendentals = 2 * b * hidden * seq               # exp for q- and k-softmax
    bytes_accessed = (b * c * seq * itemsize             # x in
                      + b * c * seq * 4                  # out
                      + (3 * hidden * c + c * hidden) * itemsize
                      + 3 * c * 4)

    out_seq = pl.pallas_call(
        kernel,
        out_shape=jax.ShapeDtypeStruct((b, c, seq), jnp.float32),
        grid_spec=pltpu.PrefetchScalarGridSpec(
            num_scalar_prefetch=0,
            grid=(b,),
            in_specs=[
                pl.BlockSpec((1, c, seq), lambda bi: (bi, 0, 0)),       # x
                pl.BlockSpec((3 * hidden, c), lambda bi: (0, 0)),       # w_qkv
                pl.BlockSpec((c, hidden), lambda bi: (0, 0)),           # w_out
                pl.BlockSpec((c, 1), lambda bi: (0, 0)),                # bias
                pl.BlockSpec((c, 1), lambda bi: (0, 0)),                # gn gamma
                pl.BlockSpec((c, 1), lambda bi: (0, 0)),                # gn beta
            ],
            out_specs=pl.BlockSpec((1, c, seq), lambda bi: (bi, 0, 0)),
        ),
        compiler_params=pltpu.CompilerParams(
            dimension_semantics=("parallel",)),
        cost_estimate=pl.CostEstimate(flops=int(flops),
                                      transcendentals=int(transcendentals),
                                      bytes_accessed=int(bytes_accessed)),
    )(x_seq, wqkv2, wout2, bias_col, gamma_col, beta_col)

    # (b, c, seq) -> (b, c, H, W): a reshape only, no transpose / extra HBM pass.
    return out_seq.reshape(b, c, H, W)


def linear_attention_reference(x, w_qkv, w_out, b_out, gn_gamma, gn_beta, *,
                               dim_keys, n_heads, eps=1e-5):
    """Pure-JAX reference mirroring the PyTorch LinearAttention.forward exactly."""
    b, c, H, W = x.shape
    seq = H * W
    hidden = dim_keys * n_heads
    scale = dim_keys ** (-0.5)

    x_seq = x.reshape(b, c, seq)
    qkv = jnp.einsum('oc,bcn->bon', w_qkv.reshape(3 * hidden, c), x_seq)
    q, k, v = jnp.split(qkv, 3, axis=1)
    r = lambda t: t.reshape(b, n_heads, dim_keys, seq)
    q, k, v = r(q), r(k), r(v)
    q = jax.nn.softmax(q, axis=-2)
    k = jax.nn.softmax(k, axis=-1)
    q = q * scale
    context = jnp.einsum('bhdn,bhen->bhde', k, v)
    res = jnp.einsum('bhde,bhdn->bhen', context, q)
    res = res.reshape(b, hidden, seq)
    out = jnp.einsum('oc,bcn->bon', w_out.reshape(c, hidden), res)
    out = out + b_out.reshape(1, c, 1)
    # GroupNorm(1, c): normalise over (c, seq) per sample, affine per channel.
    mu = out.mean(axis=(1, 2), keepdims=True)
    var = ((out - mu) ** 2).mean(axis=(1, 2), keepdims=True)
    out = (out - mu) * jax.lax.rsqrt(var + eps)
    out = out * gn_gamma.reshape(1, c, 1) + gn_beta.reshape(1, c, 1)
    return out.reshape(b, c, H, W)


if __name__ == "__main__":
    n_channels, dim_keys, n_heads = 4, 32, 2
    hidden = dim_keys * n_heads
    B, H, W = 2, 16, 16

    key = jax.random.PRNGKey(0)
    kx, kqkv, kwo, kbo, kg, kb = jax.random.split(key, 6)

    x = jax.random.normal(kx, (B, n_channels, H, W), dtype=jnp.float32)
    # Synthetic parameters with nn.Conv2d 1x1 / GroupNorm shapes.
    w_qkv = jax.random.normal(kqkv, (3 * hidden, n_channels, 1, 1),
                              dtype=jnp.float32) * 0.2
    w_out = jax.random.normal(kwo, (n_channels, hidden, 1, 1),
                              dtype=jnp.float32) * 0.2
    b_out = jax.random.normal(kbo, (n_channels,), dtype=jnp.float32) * 0.1
    gn_gamma = 1.0 + 0.1 * jax.random.normal(kg, (n_channels,), dtype=jnp.float32)
    gn_beta = 0.1 * jax.random.normal(kb, (n_channels,), dtype=jnp.float32)

    ref = linear_attention_reference(x, w_qkv, w_out, b_out, gn_gamma, gn_beta,
                                     dim_keys=dim_keys, n_heads=n_heads)

    # f32 MXU path (default; v5e-friendly — no bf16 VPU/EUP there anyway).
    out = linear_attention_forward(x, w_qkv, w_out, b_out, gn_gamma, gn_beta,
                                   dim_keys=dim_keys, n_heads=n_heads)
    out = jax.block_until_ready(out)
    assert out.shape == (B, n_channels, H, W)
    err = float(jnp.max(jnp.abs(out - ref)))
    assert jnp.allclose(out, ref, atol=5e-3, rtol=5e-3), f"f32 max err {err}"

    # bf16 MXU-input path (recommended on v6e / v7x); looser tolerance since
    # the MXU operands are rounded to bf16 (accumulation stays f32).
    out_bf16 = linear_attention_forward(x, w_qkv, w_out, b_out, gn_gamma, gn_beta,
                                        dim_keys=dim_keys, n_heads=n_heads,
                                        compute_dtype=jnp.bfloat16)
    out_bf16 = jax.block_until_ready(out_bf16)
    err_bf16 = float(jnp.max(jnp.abs(out_bf16 - ref)))
    assert jnp.allclose(out_bf16, ref, atol=7e-2, rtol=7e-2), \
        f"bf16 max err {err_bf16}"

    print("KERNEL_OK")
</pallas_src>

<mosaic_0001>
module attributes {stable_mosaic.version = 11 : i64} {
  func.func @_linear_attention_kernel(%arg0: i32, %arg1: memref<1x4x256xf32, #tpu.memory_space<vmem>>, %arg2: memref<192x4xf32, #tpu.memory_space<vmem>>, %arg3: memref<4x64xf32, #tpu.memory_space<vmem>>, %arg4: memref<4x1xf32, #tpu.memory_space<vmem>>, %arg5: memref<4x1xf32, #tpu.memory_space<vmem>>, %arg6: memref<4x1xf32, #tpu.memory_space<vmem>>, %arg7: memref<1x4x256xf32, #tpu.memory_space<vmem>>) attributes {dimension_semantics = [#tpu.dimension_semantics<parallel>], iteration_bounds = array<i64: 2>, scalar_prefetch = 0 : i64, scratch_operands = 0 : i64, tpu.core_type = #tpu.core_type<tc>, window_params = [{transform_indices = @transform_0, window_bounds = array<i64: 1, 4, 256>}, {pipeline_mode = #tpu.pipeline_mode<synchronous>, transform_indices = @transform_1, window_bounds = array<i64: 192, 4>}, {pipeline_mode = #tpu.pipeline_mode<synchronous>, transform_indices = @transform_2, window_bounds = array<i64: 4, 64>}, {pipeline_mode = #tpu.pipeline_mode<synchronous>, transform_indices = @transform_3, window_bounds = array<i64: 4, 1>}, {pipeline_mode = #tpu.pipeline_mode<synchronous>, transform_indices = @transform_4, window_bounds = array<i64: 4, 1>}, {pipeline_mode = #tpu.pipeline_mode<synchronous>, transform_indices = @transform_5, window_bounds = array<i64: 4, 1>}, {transform_indices = @transform_6, window_bounds = array<i64: 1, 4, 256>}]} {
    %c0 = arith.constant 0 : index
    %c0_0 = arith.constant 0 : index
    %c0_1 = arith.constant 0 : index
    %0 = vector.load %arg1[%c0, %c0_0, %c0_1] : memref<1x4x256xf32, #tpu.memory_space<vmem>>, vector<1x4x256xf32>
    %1 = vector.shape_cast %0 : vector<1x4x256xf32> to vector<4x256xf32>
    %c0_2 = arith.constant 0 : index
    %c0_3 = arith.constant 0 : index
    %2 = vector.load %arg2[%c0_2, %c0_3] : memref<192x4xf32, #tpu.memory_space<vmem>>, vector<192x4xf32>
    %cst = arith.constant dense<0.000000e+00> : vector<192x256xf32>
    %3 = tpu.matmul %2, %1, %cst {dimension_numbers = #tpu.dot_dimension_numbers<[1], [0], [0], [1], [0, 0, 1, 1], [], []>} : vector<192x4xf32>, vector<4x256xf32>, vector<192x256xf32> -> vector<192x256xf32>
    %4 = vector.extract_strided_slice %3 {offsets = [0, 0], sizes = [32, 256], strides = [1, 1]} : vector<192x256xf32> to vector<32x256xf32>
    %5 = vector.extract_strided_slice %3 {offsets = [64, 0], sizes = [32, 256], strides = [1, 1]} : vector<192x256xf32> to vector<32x256xf32>
    %6 = vector.extract_strided_slice %3 {offsets = [128, 0], sizes = [32, 256], strides = [1, 1]} : vector<192x256xf32> to vector<32x256xf32>
    %cst_4 = arith.constant dense<0xFF800000> : vector<256xf32>
    %7 = vector.multi_reduction <maximumf>, %4, %cst_4 [0] : vector<32x256xf32> to vector<256xf32>
    %8 = vector.shape_cast %7 : vector<256xf32> to vector<1x256xf32>
    %9 = vector.broadcast %8 : vector<1x256xf32> to vector<32x256xf32>
    %10 = arith.subf %4, %9 : vector<32x256xf32>
    %11 = math.exp %10 : vector<32x256xf32>
    %cst_5 = arith.constant dense<0.000000e+00> : vector<256xf32>
    %12 = vector.multi_reduction <add>, %11, %cst_5 [0] : vector<32x256xf32> to vector<256xf32>
    %13 = vector.shape_cast %12 : vector<256xf32> to vector<1x256xf32>
    %14 = tpu.reciprocal %13 {approx = true} : vector<1x256xf32> -> vector<1x256xf32>
    %15 = vector.broadcast %14 : vector<1x256xf32> to vector<32x256xf32>
    %16 = arith.mulf %11, %15 : vector<32x256xf32>
    %cst_6 = arith.constant dense<0xFF800000> : vector<32xf32>
    %17 = vector.multi_reduction <maximumf>, %5, %cst_6 [1] : vector<32x256xf32> to vector<32xf32>
    %18 = vector.shape_cast %17 : vector<32xf32> to vector<32x1xf32>
    %19 = vector.broadcast %18 : vector<32x1xf32> to vector<32x256xf32>
    %20 = arith.subf %5, %19 : vector<32x256xf32>
    %21 = math.exp %20 : vector<32x256xf32>
    %cst_7 = arith.constant dense<0.000000e+00> : vector<32xf32>
    %22 = vector.multi_reduction <add>, %21, %cst_7 [1] : vector<32x256xf32> to vector<32xf32>
    %23 = vector.shape_cast %22 : vector<32xf32> to vector<32x1xf32>
    %24 = tpu.reciprocal %23 {approx = true} : vector<32x1xf32> -> vector<32x1xf32>
    %25 = vector.broadcast %24 : vector<32x1xf32> to vector<32x256xf32>
    %26 = arith.mulf %21, %25 : vector<32x256xf32>
    %cst_8 = arith.constant dense<0.000000e+00> : vector<32x32xf32>
    %27 = tpu.matmul %6, %26, %cst_8 {dimension_numbers = #tpu.dot_dimension_numbers<[1], [1], [0], [0], [0, 0, 1, 0], [], []>} : vector<32x256xf32>, vector<32x256xf32>, vector<32x32xf32> -> vector<32x32xf32>
    %cst_9 = arith.constant 0.176776692 : f32
    %28 = vector.broadcast %cst_9 : f32 to vector<32x32xf32>
    %29 = arith.mulf %27, %28 : vector<32x32xf32>
    %cst_10 = arith.constant dense<0.000000e+00> : vector<32x256xf32>
    %30 = tpu.matmul %29, %16, %cst_10 {dimension_numbers = #tpu.dot_dimension_numbers<[1], [0], [0], [1], [0, 0, 1, 1], [], []>} : vector<32x32xf32>, vector<32x256xf32>, vector<32x256xf32> -> vector<32x256xf32>
    %31 = vector.extract_strided_slice %3 {offsets = [32, 0], sizes = [32, 256], strides = [1, 1]} : vector<192x256xf32> to vector<32x256xf32>
    %32 = vector.extract_strided_slice %3 {offsets = [96, 0], sizes = [32, 256], strides = [1, 1]} : vector<192x256xf32> to vector<32x256xf32>
    %33 = vector.extract_strided_slice %3 {offsets = [160, 0], sizes = [32, 256], strides = [1, 1]} : vector<192x256xf32> to vector<32x256xf32>
    %cst_11 = arith.constant dense<0xFF800000> : vector<256xf32>
    %34 = vector.multi_reduction <maximumf>, %31, %cst_11 [0] : vector<32x256xf32> to vector<256xf32>
    %35 = vector.shape_cast %34 : vector<256xf32> to vector<1x256xf32>
    %36 = vector.broadcast %35 : vector<1x256xf32> to vector<32x256xf32>
    %37 = arith.subf %31, %36 : vector<32x256xf32>
    %38 = math.exp %37 : vector<32x256xf32>
    %cst_12 = arith.constant dense<0.000000e+00> : vector<256xf32>
    %39 = vector.multi_reduction <add>, %38, %cst_12 [0] : vector<32x256xf32> to vector<256xf32>
    %40 = vector.shape_cast %39 : vector<256xf32> to vector<1x256xf32>
    %41 = tpu.reciprocal %40 {approx = true} : vector<1x256xf32> -> vector<1x256xf32>
    %42 = vector.broadcast %41 : vector<1x256xf32> to vector<32x256xf32>
    %43 = arith.mulf %38, %42 : vector<32x256xf32>
    %cst_13 = arith.constant dense<0xFF800000> : vector<32xf32>
    %44 = vector.multi_reduction <maximumf>, %32, %cst_13 [1] : vector<32x256xf32> to vector<32xf32>
    %45 = vector.shape_cast %44 : vector<32xf32> to vector<32x1xf32>
    %46 = vector.broadcast %45 : vector<32x1xf32> to vector<32x256xf32>
    %47 = arith.subf %32, %46 : vector<32x256xf32>
    %48 = math.exp %47 : vector<32x256xf32>
    %cst_14 = arith.constant dense<0.000000e+00> : vector<32xf32>
    %49 = vector.multi_reduction <add>, %48, %cst_14 [1] : vector<32x256xf32> to vector<32xf32>
    %50 = vector.shape_cast %49 : vector<32xf32> to vector<32x1xf32>
    %51 = tpu.reciprocal %50 {approx = true} : vector<32x1xf32> -> vector<32x1xf32>
    %52 = vector.broadcast %51 : vector<32x1xf32> to vector<32x256xf32>
    %53 = arith.mulf %48, %52 : vector<32x256xf32>
    %cst_15 = arith.constant dense<0.000000e+00> : vector<32x32xf32>
    %54 = tpu.matmul %33, %53, %cst_15 {dimension_numbers = #tpu.dot_dimension_numbers<[1], [1], [0], [0], [0, 0, 1, 0], [], []>} : vector<32x256xf32>, vector<32x256xf32>, vector<32x32xf32> -> vector<32x32xf32>
    %cst_16 = arith.constant 0.176776692 : f32
    %55 = vector.broadcast %cst_16 : f32 to vector<32x32xf32>
    %56 = arith.mulf %54, %55 : vector<32x32xf32>
    %cst_17 = arith.constant dense<0.000000e+00> : vector<32x256xf32>
    %57 = tpu.matmul %56, %43, %cst_17 {dimension_numbers = #tpu.dot_dimension_numbers<[1], [0], [0], [1], [0, 0, 1, 1], [], []>} : vector<32x32xf32>, vector<32x256xf32>, vector<32x256xf32> -> vector<32x256xf32>
    %58 = tpu.concatenate %30, %57 in 0 : vector<32x256xf32>, vector<32x256xf32> -> vector<64x256xf32>
    %c0_18 = arith.constant 0 : index
    %c0_19 = arith.constant 0 : index
    %59 = vector.load %arg3[%c0_18, %c0_19] : memref<4x64xf32, #tpu.memory_space<vmem>>, vector<4x64xf32>
    %cst_20 = arith.constant dense<0.000000e+00> : vector<4x256xf32>
    %60 = tpu.matmul %59, %58, %cst_20 {dimension_numbers = #tpu.dot_dimension_numbers<[1], [0], [0], [1], [0, 0, 1, 1], [], []>} : vector<4x64xf32>, vector<64x256xf32>, vector<4x256xf32> -> vector<4x256xf32>
    %c0_21 = arith.constant 0 : index
    %c0_22 = arith.constant 0 : index
    %61 = vector.load %arg4[%c0_21, %c0_22] : memref<4x1xf32, #tpu.memory_space<vmem>>, vector<4x1xf32>
    %62 = vector.broadcast %61 : vector<4x1xf32> to vector<4x256xf32>
    %63 = arith.addf %60, %62 : vector<4x256xf32>
    %64 = vector.shape_cast %63 : vector<4x256xf32> to vector<1x4x256xf32>
    %cst_23 = arith.constant dense<0.000000e+00> : vector<1xf32>
    %65 = vector.multi_reduction <add>, %64, %cst_23 [1, 2] : vector<1x4x256xf32> to vector<1xf32>
    %66 = vector.shape_cast %65 : vector<1xf32> to vector<1x1x1xf32>
    %67 = vector.extract %66[0, 0, 0] : f32 from vector<1x1x1xf32>
    %68 = vector.broadcast %67 : f32 to vector<1x1xf32>
    %cst_24 = arith.constant 1.024000e+03 : f32
    %69 = vector.broadcast %cst_24 : f32 to vector<1x1xf32>
    %70 = arith.divf %68, %69 : vector<1x1xf32>
    %71 = vector.broadcast %70 : vector<1x1xf32> to vector<4x256xf32>
    %72 = arith.subf %63, %71 : vector<4x256xf32>
    %73 = arith.mulf %72, %72 : vector<4x256xf32>
    %74 = vector.shape_cast %73 : vector<4x256xf32> to vector<1x4x256xf32>
    %cst_25 = arith.constant dense<0.000000e+00> : vector<1xf32>
    %75 = vector.multi_reduction <add>, %74, %cst_25 [1, 2] : vector<1x4x256xf32> to vector<1xf32>
    %76 = vector.shape_cast %75 : vector<1xf32> to vector<1x1x1xf32>
    %77 = vector.extract %76[0, 0, 0] : f32 from vector<1x1x1xf32>
    %78 = vector.broadcast %77 : f32 to vector<1x1xf32>
    %cst_26 = arith.constant 1.024000e+03 : f32
    %79 = vector.broadcast %cst_26 : f32 to vector<1x1xf32>
    %80 = arith.divf %78, %79 : vector<1x1xf32>
    %cst_27 = arith.constant 9.99999974E-6 : f32
    %81 = vector.broadcast %cst_27 : f32 to vector<1x1xf32>
    %82 = arith.addf %80, %81 : vector<1x1xf32>
    %83 = math.rsqrt %82 : vector<1x1xf32>
    %84 = vector.broadcast %83 : vector<1x1xf32> to vector<4x256xf32>
    %85 = arith.mulf %72, %84 : vector<4x256xf32>
    %c0_28 = arith.constant 0 : index
    %c0_29 = arith.constant 0 : index
    %86 = vector.load %arg5[%c0_28, %c0_29] : memref<4x1xf32, #tpu.memory_space<vmem>>, vector<4x1xf32>
    %87 = vector.broadcast %86 : vector<4x1xf32> to vector<4x256xf32>
    %88 = arith.mulf %85, %87 : vector<4x256xf32>
    %c0_30 = arith.constant 0 : index
    %c0_31 = arith.constant 0 : index
    %89 = vector.load %arg6[%c0_30, %c0_31] : memref<4x1xf32, #tpu.memory_space<vmem>>, vector<4x1xf32>
    %90 = vector.broadcast %89 : vector<4x1xf32> to vector<4x256xf32>
    %91 = arith.addf %88, %90 : vector<4x256xf32>
    %c0_32 = arith.constant 0 : index
    %c0_33 = arith.constant 0 : index
    %c0_34 = arith.constant 0 : index
    %92 = vector.load %arg7[%c0_32, %c0_33, %c0_34] : memref<1x4x256xf32, #tpu.memory_space<vmem>>, vector<1x4x256xf32>
    %93 = vector.shape_cast %92 : vector<1x4x256xf32> to vector<4x256xf32>
    %94 = vector.shape_cast %91 : vector<4x256xf32> to vector<1x4x256xf32>
    tpu.vector_store %arg7[%c0_32, %c0_33, %c0_34], %94 {strides = array<i32>} : memref<1x4x256xf32, #tpu.memory_space<vmem>>, vector<1x4x256xf32>,
    return
  }
  func.func @transform_0(%arg0: i32) -> (i32, i32, i32) {
    %c0_i32 = arith.constant 0 : i32
    %c0_i32_0 = arith.constant 0 : i32
    %c0_i32_1 = arith.constant 0 : i32
    return %arg0, %c0_i32, %c0_i32_0 : i32, i32, i32
  }
  func.func @transform_1(%arg0: i32) -> (i32, i32) {
    %c0_i32 = arith.constant 0 : i32
    %c0_i32_0 = arith.constant 0 : i32
    %c0_i32_1 = arith.constant 0 : i32
    return %c0_i32, %c0_i32_0 : i32, i32
  }
  func.func @transform_2(%arg0: i32) -> (i32, i32) {
    %c0_i32 = arith.constant 0 : i32
    %c0_i32_0 = arith.constant 0 : i32
    %c0_i32_1 = arith.constant 0 : i32
    return %c0_i32, %c0_i32_0 : i32, i32
  }
  func.func @transform_3(%arg0: i32) -> (i32, i32) {
    %c0_i32 = arith.constant 0 : i32
    %c0_i32_0 = arith.constant 0 : i32
    %c0_i32_1 = arith.constant 0 : i32
    return %c0_i32, %c0_i32_0 : i32, i32
  }
  func.func @transform_4(%arg0: i32) -> (i32, i32) {
    %c0_i32 = arith.constant 0 : i32
    %c0_i32_0 = arith.constant 0 : i32
    %c0_i32_1 = arith.constant 0 : i32
    return %c0_i32, %c0_i32_0 : i32, i32
  }
  func.func @transform_5(%arg0: i32) -> (i32, i32) {
    %c0_i32 = arith.constant 0 : i32
    %c0_i32_0 = arith.constant 0 : i32
    %c0_i32_1 = arith.constant 0 : i32
    return %c0_i32, %c0_i32_0 : i32, i32
  }
  func.func @transform_6(%arg0: i32) -> (i32, i32, i32) {
    %c0_i32 = arith.constant 0 : i32
    %c0_i32_0 = arith.constant 0 : i32
    %c0_i32_1 = arith.constant 0 : i32
    return %arg0, %c0_i32, %c0_i32_0 : i32, i32, i32
  }
}

</mosaic_0001>

<llo_original>
// kernel: tpu_custom_call.1
$region0: #{tpu_custom_call.1}
  #allocation0 [shape = 'u32[]', space=smem, size = 0x4, offset = 0x4, fixed_abs, tag = 'smem constant byte address 0x4 - core index']
  #allocation1 [shape = 'u32[72,128]{1,0:T(1,128)}', space=vmem, size = 0x9000, scoped, tag = 'internal scratch']
  %s0 = inlined_call_operand.vmem [shape: f32[2,4,256], index: 0, kind: input, shape index: {}]
  %s1 = inlined_call_operand.vmem [shape: f32[192,4], index: 1, kind: input, shape index: {}]
  %s2 = inlined_call_operand.vmem [shape: f32[4,64], index: 2, kind: input, shape index: {}]
  %s3 = inlined_call_operand.vmem [shape: f32[4,1], index: 3, kind: input, shape index: {}]
  %s4 = inlined_call_operand.vmem [shape: f32[4,1], index: 4, kind: input, shape index: {}]
  %s5 = inlined_call_operand.vmem [shape: f32[4,1], index: 5, kind: input, shape index: {}]
  %s6 = inlined_call_operand.hbm [shape: f32[2,4,256], index: 6, kind: output, shape index: {}]
  %s7 = sld [smem:[#allocation0]]
  $region57: #{tpu_custom_call.1} parent=0
    _
  %s9 = ssub.s32 1, %s7
  %s10 = scalar_select 0, %s9, %s7
  $region1: #{tpu_custom_call.1} parent=0
    #allocation2 [shape = 'u8[8192]{0}', space=vmem, size = 0x2000, scoped, tag = 'output window, operand 0']
    #allocation3 [shape = 's32[2]{0}', space=sflag, size = 0x8, scoped, tag = 'scoped memory for tpu_custom_call.1']
    %11 = vsyncpa [#allocation3], 0
    %s12 = scalar_lea.sflag [#allocation3], 1
    %13 = vsyncpa %s12, 0
    loop: start=0, step=1, limit=4
    $region2: #{tpu_custom_call.1} parent=1 // loop_pre_header
      _
    $region3: #{tpu_custom_call.1} parent=1 // loop_header
      %s15 = sphi 0, %s19
      %p16 = scmp.ge.s32.totalorder %s15, 4
      %s25 = sphi 0, %s27
      %s28 = sphi 0, %s25
      %s29 = sphi 0, %s28
      %s45 = sphi 0, %s29
      %s49 = sphi 0, %s49
      %s51 = sphi 0, %s49
      %s52 = sphi 0, %s51
      %s66 = sphi 0, %s52
      %s70 = sphi 0, %s70
      %s72 = sphi 0, %s70
      %s73 = sphi 0, %s72
      %s87 = sphi 0, %s73
      %s91 = sphi 0, %s91
      %s93 = sphi 0, %s91
      %s94 = sphi 0, %s93
      %s108 = sphi 0, %s94
      %s112 = sphi 0, %s112
      %s114 = sphi 0, %s112
      %s115 = sphi 0, %s114
      %s129 = sphi 0, %s115
      %s133 = sphi 0, %s133
      %s135 = sphi 0, %s133
      %s136 = sphi 0, %s135
      %s150 = sphi 0, %s136
      %s156 = sphi 0, %s158
      %s159 = sphi 0, %s156
      %s160 = sphi 0, %s159
      %s176 = sphi 0, %s160
    $region4: #{tpu_custom_call.1} parent=1 // loop_header_branch
      %18 = sbr.rel (%p16) target = $region8
    $region5: #{tpu_custom_call.1} parent=1 // loop_body
      %s20 = ssub.s32 %s15, 1
      %s21 = ssub.s32 %s15, 2
      %s22 = sadd.s32 %s15, 1
      %s23 = ssub.s32 %s15, %s22
      %p24 = scmp.eq.s32.totalorder %s23, 0
      %s26 = sadd.s32 %s25, 1
      %s27 = scalar_select %p24, %s25, %s26
      %p30 = pneg %p24
      %p31 = scmp.eq.s32.totalorder %s15, 1
      %p32 = por %p30, %p31
      %p33 = scmp.ne.s32.totalorder %s25, %s28
      %p34 = scmp.eq.s32.totalorder %s15, 0
      %p35 = por %p33, %p34
      %p36 = scmp.ne.s32.totalorder %s25, %s28
      %p37 = scmp.eq.s32.totalorder %s20, 1
      %p38 = por %p36, %p37
      %p39 = scmp.ne.s32.totalorder %s28, %s29
      %p40 = scmp.eq.s32.totalorder %s20, 0
      %p41 = por %p39, %p40
      %p42 = scmp.ne.s32.totalorder %s28, %s29
      %p43 = scmp.eq.s32.totalorder %s21, 1
      %p44 = por %p42, %p43
      %p46 = scmp.ne.s32.totalorder %s29, %s45
      %p47 = scmp.eq.s32.totalorder %s21, 0
      %p48 = por %p46, %p47
      %s50 = sadd.s32 %s49, 1
      %p53 = scmp.eq.s32.totalorder %s15, 1
      %p54 = scmp.ne.s32.totalorder %s49, %s51
      %p55 = scmp.eq.s32.totalorder %s15, 0
      %p56 = por %p54, %p55
      %p57 = scmp.ne.s32.totalorder %s49, %s51
      %p58 = scmp.eq.s32.totalorder %s20, 1
      %p59 = por %p57, %p58
      %p60 = scmp.ne.s32.totalorder %s51, %s52
      %p61 = scmp.eq.s32.totalorder %s20, 0
      %p62 = por %p60, %p61
      %p63 = scmp.ne.s32.totalorder %s51, %s52
      %p64 = scmp.eq.s32.totalorder %s21, 1
      %p65 = por %p63, %p64
      %p67 = scmp.ne.s32.totalorder %s52, %s66
      %p68 = scmp.eq.s32.totalorder %s21, 0
      %p69 = por %p67, %p68
      %s71 = sadd.s32 %s70, 1
      %p74 = scmp.eq.s32.totalorder %s15, 1
      %p75 = scmp.ne.s32.totalorder %s70, %s72
      %p76 = scmp.eq.s32.totalorder %s15, 0
      %p77 = por %p75, %p76
      %p78 = scmp.ne.s32.totalorder %s70, %s72
      %p79 = scmp.eq.s32.totalorder %s20, 1
      %p80 = por %p78, %p79
      %p81 = scmp.ne.s32.totalorder %s72, %s73
      %p82 = scmp.eq.s32.totalorder %s20, 0
      %p83 = por %p81, %p82
      %p84 = scmp.ne.s32.totalorder %s72, %s73
      %p85 = scmp.eq.s32.totalorder %s21, 1
      %p86 = por %p84, %p85
      %p88 = scmp.ne.s32.totalorder %s73, %s87
      %p89 = scmp.eq.s32.totalorder %s21, 0
      %p90 = por %p88, %p89
      %s92 = sadd.s32 %s91, 1
      %p95 = scmp.eq.s32.totalorder %s15, 1
      %p96 = scmp.ne.s32.totalorder %s91, %s93
      %p97 = scmp.eq.s32.totalorder %s15, 0
      %p98 = por %p96, %p97
      %p99 = scmp.ne.s32.totalorder %s91, %s93
      %p100 = scmp.eq.s32.totalorder %s20, 1
      %p101 = por %p99, %p100
      %p102 = scmp.ne.s32.totalorder %s93, %s94
      %p103 = scmp.eq.s32.totalorder %s20, 0
      %p104 = por %p102, %p103
      %p105 = scmp.ne.s32.totalorder %s93, %s94
      %p106 = scmp.eq.s32.totalorder %s21, 1
      %p107 = por %p105, %p106
      %p109 = scmp.ne.s32.totalorder %s94, %s108
      %p110 = scmp.eq.s32.totalorder %s21, 0
      %p111 = por %p109, %p110
      %s113 = sadd.s32 %s112, 1
      %p116 = scmp.eq.s32.totalorder %s15, 1
      %p117 = scmp.ne.s32.totalorder %s112, %s114
      %p118 = scmp.eq.s32.totalorder %s15, 0
      %p119 = por %p117, %p118
      %p120 = scmp.ne.s32.totalorder %s112, %s114
      %p121 = scmp.eq.s32.totalorder %s20, 1
      %p122 = por %p120, %p121
      %p123 = scmp.ne.s32.totalorder %s114, %s115
      %p124 = scmp.eq.s32.totalorder %s20, 0
      %p125 = por %p123, %p124
      %p126 = scmp.ne.s32.totalorder %s114, %s115
      %p127 = scmp.eq.s32.totalorder %s21, 1
      %p128 = por %p126, %p127
      %p130 = scmp.ne.s32.totalorder %s115, %s129
      %p131 = scmp.eq.s32.totalorder %s21, 0
      %p132 = por %p130, %p131
      %s134 = sadd.s32 %s133, 1
      %p137 = scmp.eq.s32.totalorder %s15, 1
      %p138 = scmp.ne.s32.totalorder %s133, %s135
      %p139 = scmp.eq.s32.totalorder %s15, 0
      %p140 = por %p138, %p139
      %p141 = scmp.ne.s32.totalorder %s133, %s135
      %p142 = scmp.eq.s32.totalorder %s20, 1
      %p143 = por %p141, %p142
      %p144 = scmp.ne.s32.totalorder %s135, %s136
      %p145 = scmp.eq.s32.totalorder %s20, 0
      %p146 = por %p144, %p145
      %p147 = scmp.ne.s32.totalorder %s135, %s136
      %p148 = scmp.eq.s32.totalorder %s21, 1
      %p149 = por %p147, %p148
      %p151 = scmp.ne.s32.totalorder %s136, %s150
      %p152 = scmp.eq.s32.totalorder %s21, 0
      %p153 = por %p151, %p152
      %s154 = ssub.s32 %s15, %s22
      %p155 = scmp.eq.s32.totalorder %s154, 0
      %s157 = sadd.s32 %s156, 1
      %s158 = scalar_select %p155, %s156, %s157
      %p161 = pneg %p155
      %p162 = scmp.eq.s32.totalorder %s15, 1
      %p163 = por %p161, %p162
      %p164 = scmp.ne.s32.totalorder %s156, %s159
      %p165 = scmp.eq.s32.totalorder %s15, 0
      %p166 = por %p164, %p165
      %p167 = scmp.ne.s32.totalorder %s156, %s159
      %p168 = scmp.eq.s32.totalorder %s20, 1
      %p169 = por %p167, %p168
      %p170 = scmp.ne.s32.totalorder %s159, %s160
      %p171 = scmp.eq.s32.totalorder %s20, 0
      %p172 = por %p170, %p171
      %p173 = scmp.ne.s32.totalorder %s159, %s160
      %p174 = scmp.eq.s32.totalorder %s21, 1
      %p175 = por %p173, %p174
      %p177 = scmp.ne.s32.totalorder %s160, %s176
      %p178 = scmp.eq.s32.totalorder %s21, 0
      %p179 = por %p177, %p178
      %p180 = scmp.le.s32.totalorder 1, %s15
      %p181 = scmp.lt.s32.totalorder %s15, 3
      %p182 = pnand %p180, %p181
      %p183 = pneg %p182
      // Predicated region
      $region9: #{tpu_custom_call.1} parent=5 // pred_check
        _
      $region10: #{tpu_custom_call.1} parent=5 // pred_check_branch
        %185 = sbr.rel (%p182) target = $region12
      $region11: #{tpu_custom_call.1} parent=5 // pred_region
        %s186 = ssub.s32 %s15, 1
        // Predicated region
        $region13: #{tpu_custom_call.1} parent=11 // pred_check
          %p187 = pneg %p62
        $region14: #{tpu_custom_call.1} parent=11 // pred_check_branch
          %189 = sbr.rel (%p187) target = $region16
        $region15: #{tpu_custom_call.1} parent=11 // pred_region
          _
        $region16: #{tpu_custom_call.1} parent=11 // pred_fallthru
          _
        // Predicated region
        $region17: #{tpu_custom_call.1} parent=11 // pred_check
          %p190 = pneg %p83
        $region18: #{tpu_custom_call.1} parent=11 // pred_check_branch
          %192 = sbr.rel (%p190) target = $region20
        $region19: #{tpu_custom_call.1} parent=11 // pred_region
          _
        $region20: #{tpu_custom_call.1} parent=11 // pred_fallthru
          _
        // Predicated region
        $region21: #{tpu_custom_call.1} parent=11 // pred_check
          %p193 = pneg %p104
        $region22: #{tpu_custom_call.1} parent=11 // pred_check_branch
          %195 = sbr.rel (%p193) target = $region24
        $region23: #{tpu_custom_call.1} parent=11 // pred_region
          _
        $region24: #{tpu_custom_call.1} parent=11 // pred_fallthru
          _
        // Predicated region
        $region25: #{tpu_custom_call.1} parent=11 // pred_check
          %p196 = pneg %p125
        $region26: #{tpu_custom_call.1} parent=11 // pred_check_branch
          %198 = sbr.rel (%p196) target = $region28
        $region27: #{tpu_custom_call.1} parent=11 // pred_region
          _
        $region28: #{tpu_custom_call.1} parent=11 // pred_fallthru
          _
        // Predicated region
        $region29: #{tpu_custom_call.1} parent=11 // pred_check
          %p199 = pneg %p146
        $region30: #{tpu_custom_call.1} parent=11 // pred_check_branch
          %201 = sbr.rel (%p199) target = $region32
        $region31: #{tpu_custom_call.1} parent=11 // pred_region
          _
        $region32: #{tpu_custom_call.1} parent=11 // pred_fallthru
          _
      $region12: #{tpu_custom_call.1} parent=5 // pred_fallthru
        _
      %p202 = scmp.lt.s32.totalorder %s15, 2
      // Predicated region
      $region33: #{tpu_custom_call.1} parent=5 // pred_check
        %p203 = pneg %p202
      $region34: #{tpu_custom_call.1} parent=5 // pred_check_branch
        %205 = sbr.rel (%p203) target = $region36
      $region35: #{tpu_custom_call.1} parent=5 // pred_region
        // Predicated region
        $region37: #{tpu_custom_call.1} parent=35 // pred_check
          %p206 = pneg %p35
        $region38: #{tpu_custom_call.1} parent=35 // pred_check_branch
          %208 = sbr.rel (%p206) target = $region40
        $region39: #{tpu_custom_call.1} parent=35 // pred_region
          %p209 = scmp.lt.s32.totalorder %s15, 1
          %s210 = scalar_select %p209, %s15, 1
          %s211 = smul.addr %s210, 2
          %s212 = smul.addr %s211, 4
          %s213 = scalar_lea.vmem %s0, %s212
        $region40: #{tpu_custom_call.1} parent=35 // pred_fallthru
          _
      $region36: #{tpu_custom_call.1} parent=5 // pred_fallthru
        _
      %p214 = scmp.le.s32.totalorder 1, %s15
      %p215 = scmp.lt.s32.totalorder %s15, 3
      %p216 = pnand %p214, %p215
      %p217 = pneg %p216
      // Predicated region
      $region41: #{tpu_custom_call.1} parent=5 // pred_check
        _
      $region42: #{tpu_custom_call.1} parent=5 // pred_check_branch
        %219 = sbr.rel (%p216) target = $region44
      $region43: #{tpu_custom_call.1} parent=5 // pred_region
        %s220 = ssub.s32 %s15, 1
        %p221 = scmp.lt.s32.totalorder %s20, 1
        %s222 = scalar_select %p221, %s20, 1
        %s223 = smul.addr %s222, 2
        %s224 = smul.addr %s223, 4
        %s225 = scalar_lea.vmem %s0, %s224
        %p226 = pneg %p41
        %p227 = pneg %p38
        %p228 = pneg %p62
        %p229 = pneg %p59
        %p230 = pneg %p83
        %p231 = pneg %p80
        %p232 = pneg %p104
        %p233 = pneg %p101
        %p234 = pneg %p125
        %p235 = pneg %p122
        %p236 = pneg %p146
        %p237 = pneg %p143
        %p238 = pneg %p172
        %p239 = pneg %p169
        %s240 = sand.u32 %s159, 1
        %s241 = scalar_lea.sflag [#allocation3], %s240
        %s242 = sand.u32 %s159, 1
        %s243 = smul.addr %s242, 8
        %s244 = scalar_lea.vmem [#allocation2], %s243
        %p245 = scmp.lt.s32.totalorder %s20, 1
        %s246 = scalar_select %p245, %s20, 1
        %s247 = smul.addr %s246, 2
        %s248 = smul.addr %s247, 4
        %s249 = scalar_lea.vmem %s0, %s248
        %v250 = vld [vmem:[%s249] sm:$0xff]
        %v251 = vld [vmem:[%s1] sm:$0xff]
        %v252 = vld [vmem:[%s1 + $0x8] sm:$0xff]
        %v253 = vld [vmem:[%s1 + $0x10] sm:$0xff]
        %v254 = vld [vmem:[%s1 + $0x18] sm:$0xff]
        %v255 = vld [vmem:[%s1 + $0x20] sm:$0xff]
        %v256 = vld [vmem:[%s1 + $0x28] sm:$0xff]
        %v257 = vld [vmem:[%s1 + $0x30] sm:$0xff]
        %v258 = vld [vmem:[%s1 + $0x38] sm:$0xff]
        %v259 = vld [vmem:[%s1 + $0x40] sm:$0xff]
        %v260 = vld [vmem:[%s1 + $0x48] sm:$0xff]
        %v261 = vld [vmem:[%s1 + $0x50] sm:$0xff]
        %v262 = vld [vmem:[%s1 + $0x58] sm:$0xff]
        %v263 = vld [vmem:[%s1 + $0x60] sm:$0xff]
        %v264 = vld [vmem:[%s1 + $0x68] sm:$0xff]
        %v265 = vld [vmem:[%s1 + $0x70] sm:$0xff]
        %v266 = vld [vmem:[%s1 + $0x78] sm:$0xff]
        %v267 = vld [vmem:[%s1 + $0x80] sm:$0xff]
        %v268 = vld [vmem:[%s1 + $0x88] sm:$0xff]
        %v269 = vld [vmem:[%s1 + $0x90] sm:$0xff]
        %v270 = vld [vmem:[%s1 + $0x98] sm:$0xff]
        %v271 = vld [vmem:[%s1 + $0xa0] sm:$0xff]
        %v272 = vld [vmem:[%s1 + $0xa8] sm:$0xff]
        %v273 = vld [vmem:[%s1 + $0xb0] sm:$0xff]
        %v274 = vld [vmem:[%s1 + $0xb8] sm:$0xff]
        %276 = vst [vmem:[#allocation1] ss:$2 sm:$0xff] %v250
        %v277 = vld.sshfl [vmem:[#allocation1] sm:$0xff pattern:$0x75316420]
        %v278 = vld.sshfl [vmem:[#allocation1 + $0x8] sm:$0xff pattern:$0x75316420]
        %vm279 = vcmask 31744
        %v281 = vsel %vm279, %v251, 0
        %v284 = vsel %vm279, %v252, 0
        %v287 = vsel %vm279, %v253, 0
        %v290 = vsel %vm279, %v254, 0
        %v293 = vsel %vm279, %v255, 0
        %v296 = vsel %vm279, %v256, 0
        %v299 = vsel %vm279, %v257, 0
        %v302 = vsel %vm279, %v258, 0
        %v305 = vsel %vm279, %v259, 0
        %v308 = vsel %vm279, %v260, 0
        %v311 = vsel %vm279, %v261, 0
        %v314 = vsel %vm279, %v262, 0
        %v317 = vsel %vm279, %v263, 0
        %v320 = vsel %vm279, %v264, 0
        %v323 = vsel %vm279, %v265, 0
        %v326 = vsel %vm279, %v266, 0
        %v329 = vsel %vm279, %v267, 0
        %v332 = vsel %vm279, %v268, 0
        %v335 = vsel %vm279, %v269, 0
        %v338 = vsel %vm279, %v270, 0
        %v341 = vsel %vm279, %v271, 0
        %v344 = vsel %vm279, %v272, 0
        %v347 = vsel %vm279, %v273, 0
        %v350 = vsel %vm279, %v274, 0
        %vm352 = vcmask 1043456
        %v353 = vsel %vm352, %v277, 0
        %v355 = vsel %vm352, %v278, 0
        %357 = vmatpush.msra.mxu0 0.0
        %358 = vmatpush.msra.mxu0 0.0
        %359 = vmatpush.msra.mxu0 0.0
        %360 = vmatpush.msra.mxu0 0.0
        %361 = vmatpush.msra.mxu0 0.0
        %362 = vmatpush.msra.mxu0 0.0
        %363 = vmatpush.msra.mxu0 0.0
        %364 = vmatpush.msra.mxu0 0.0
        %365 = vmatpush.msra.mxu0 0.0
        %366 = vmatpush.msra.mxu0 0.0
        %367 = vmatpush.msra.mxu0 0.0
        %368 = vmatpush.msra.mxu0 0.0
        %369 = vmatpush.msra.mxu0 0.0
        %370 = vmatpush.msra.mxu0 0.0
        %371 = vmatpush.msra.mxu0 0.0
        %372 = vmatpush.msra.mxu0 %v353
        %373 = vmatmul.f32.gmra.mxu0 %v281
        %v374 = vpop.f32.mrf.mxu0
        %v375 = vadd.f32 0.0, %v374
        %376 = vmatmul.f32.gmra.mxu0 %v284
        %v377 = vpop.f32.mrf.mxu0
        %v378 = vadd.f32 0.0, %v377
        %379 = vmatmul.f32.gmra.mxu0 %v287
        %v380 = vpop.f32.mrf.mxu0
        %v381 = vadd.f32 0.0, %v380
        %382 = vmatmul.f32.gmra.mxu0 %v290
        %v383 = vpop.f32.mrf.mxu0
        %v384 = vadd.f32 0.0, %v383
        %385 = vmatmul.f32.gmra.mxu0 %v293
        %v386 = vpop.f32.mrf.mxu0
        %v387 = vadd.f32 0.0, %v386
        %388 = vmatmul.f32.gmra.mxu0 %v296
        %v389 = vpop.f32.mrf.mxu0
        %v390 = vadd.f32 0.0, %v389
        %391 = vmatmul.f32.gmra.mxu0 %v299
        %v392 = vpop.f32.mrf.mxu0
        %v393 = vadd.f32 0.0, %v392
        %394 = vmatmul.f32.gmra.mxu0 %v302
        %v395 = vpop.f32.mrf.mxu0
        %v396 = vadd.f32 0.0, %v395
        %397 = vmatmul.f32.gmra.mxu0 %v305
        %v398 = vpop.f32.mrf.mxu0
        %v399 = vadd.f32 0.0, %v398
        %400 = vmatmul.f32.gmra.mxu0 %v308
        %v401 = vpop.f32.mrf.mxu0
        %v402 = vadd.f32 0.0, %v401
        %403 = vmatmul.f32.gmra.mxu0 %v311
        %v404 = vpop.f32.mrf.mxu0
        %v405 = vadd.f32 0.0, %v404
        %406 = vmatmul.f32.gmra.mxu0 %v314
        %v407 = vpop.f32.mrf.mxu0
        %v408 = vadd.f32 0.0, %v407
        %409 = vmatmul.f32.gmra.mxu0 %v317
        %v410 = vpop.f32.mrf.mxu0
        %v411 = vadd.f32 0.0, %v410
        %412 = vmatmul.f32.gmra.mxu0 %v320
        %v413 = vpop.f32.mrf.mxu0
        %v414 = vadd.f32 0.0, %v413
        %415 = vmatmul.f32.gmra.mxu0 %v323
        %v416 = vpop.f32.mrf.mxu0
        %v417 = vadd.f32 0.0, %v416
        %418 = vmatmul.f32.gmra.mxu0 %v326
        %v419 = vpop.f32.mrf.mxu0
        %v420 = vadd.f32 0.0, %v419
        %421 = vmatmul.f32.gmra.mxu0 %v329
        %v422 = vpop.f32.mrf.mxu0
        %v423 = vadd.f32 0.0, %v422
        %424 = vmatmul.f32.gmra.mxu0 %v332
        %v425 = vpop.f32.mrf.mxu0
        %v426 = vadd.f32 0.0, %v425
        %427 = vmatmul.f32.gmra.mxu0 %v335
        %v428 = vpop.f32.mrf.mxu0
        %v429 = vadd.f32 0.0, %v428
        %430 = vmatmul.f32.gmra.mxu0 %v338
        %v431 = vpop.f32.mrf.mxu0
        %v432 = vadd.f32 0.0, %v431
        %433 = vmatmul.f32.gmra.mxu0 %v341
        %v434 = vpop.f32.mrf.mxu0
        %v435 = vadd.f32 0.0, %v434
        %436 = vmatmul.f32.gmra.mxu0 %v344
        %v437 = vpop.f32.mrf.mxu0
        %v438 = vadd.f32 0.0, %v437
        %439 = vmatmul.f32.gmra.mxu0 %v347
        %v440 = vpop.f32.mrf.mxu0
        %v441 = vadd.f32 0.0, %v440
        %442 = vmatmul.f32.gmra.mxu0 %v350
        %v443 = vpop.f32.mrf.mxu0
        %v444 = vadd.f32 0.0, %v443
        %445 = vdwg.mxu0
        %446 = vmatpush.msra.mxu0 0.0
        %447 = vmatpush.msra.mxu0 0.0
        %448 = vmatpush.msra.mxu0 0.0
        %449 = vmatpush.msra.mxu0 0.0
        %450 = vmatpush.msra.mxu0 0.0
        %451 = vmatpush.msra.mxu0 0.0
        %452 = vmatpush.msra.mxu0 0.0
        %453 = vmatpush.msra.mxu0 0.0
        %454 = vmatpush.msra.mxu0 0.0
        %455 = vmatpush.msra.mxu0 0.0
        %456 = vmatpush.msra.mxu0 0.0
        %457 = vmatpush.msra.mxu0 0.0
        %458 = vmatpush.msra.mxu0 0.0
        %459 = vmatpush.msra.mxu0 0.0
        %460 = vmatpush.msra.mxu0 0.0
        %461 = vmatpush.msra.mxu0 %v355
        %462 = vmatmul.f32.gmra.mxu0 %v281
        %v463 = vpop.f32.mrf.mxu0
        %v464 = vadd.f32 0.0, %v463
        %465 = vmatmul.f32.gmra.mxu0 %v284
        %v466 = vpop.f32.mrf.mxu0
        %v467 = vadd.f32 0.0, %v466
        %468 = vmatmul.f32.gmra.mxu0 %v287
        %v469 = vpop.f32.mrf.mxu0
        %v470 = vadd.f32 0.0, %v469
        %471 = vmatmul.f32.gmra.mxu0 %v290
        %v472 = vpop.f32.mrf.mxu0
        %v473 = vadd.f32 0.0, %v472
        %474 = vmatmul.f32.gmra.mxu0 %v293
        %v475 = vpop.f32.mrf.mxu0
        %v476 = vadd.f32 0.0, %v475
        %477 = vmatmul.f32.gmra.mxu0 %v296
        %v478 = vpop.f32.mrf.mxu0
        %v479 = vadd.f32 0.0, %v478
        %480 = vmatmul.f32.gmra.mxu0 %v299
        %v481 = vpop.f32.mrf.mxu0
        %v482 = vadd.f32 0.0, %v481
        %483 = vmatmul.f32.gmra.mxu0 %v302
        %v484 = vpop.f32.mrf.mxu0
        %v485 = vadd.f32 0.0, %v484
        %486 = vmatmul.f32.gmra.mxu0 %v305
        %v487 = vpop.f32.mrf.mxu0
        %v488 = vadd.f32 0.0, %v487
        %489 = vmatmul.f32.gmra.mxu0 %v308
        %v490 = vpop.f32.mrf.mxu0
        %v491 = vadd.f32 0.0, %v490
        %492 = vmatmul.f32.gmra.mxu0 %v311
        %v493 = vpop.f32.mrf.mxu0
        %v494 = vadd.f32 0.0, %v493
        %495 = vmatmul.f32.gmra.mxu0 %v314
        %v496 = vpop.f32.mrf.mxu0
        %v497 = vadd.f32 0.0, %v496
        %498 = vmatmul.f32.gmra.mxu0 %v317
        %v499 = vpop.f32.mrf.mxu0
        %v500 = vadd.f32 0.0, %v499
        %501 = vmatmul.f32.gmra.mxu0 %v320
        %v502 = vpop.f32.mrf.mxu0
        %v503 = vadd.f32 0.0, %v502
        %504 = vmatmul.f32.gmra.mxu0 %v323
        %v505 = vpop.f32.mrf.mxu0
        %v506 = vadd.f32 0.0, %v505
        %507 = vmatmul.f32.gmra.mxu0 %v326
        %v508 = vpop.f32.mrf.mxu0
        %v509 = vadd.f32 0.0, %v508
        %510 = vmatmul.f32.gmra.mxu0 %v329
        %v511 = vpop.f32.mrf.mxu0
        %v512 = vadd.f32 0.0, %v511
        %513 = vmatmul.f32.gmra.mxu0 %v332
        %v514 = vpop.f32.mrf.mxu0
        %v515 = vadd.f32 0.0, %v514
        %516 = vmatmul.f32.gmra.mxu0 %v335
        %v517 = vpop.f32.mrf.mxu0
        %v518 = vadd.f32 0.0, %v517
        %519 = vmatmul.f32.gmra.mxu0 %v338
        %v520 = vpop.f32.mrf.mxu0
        %v521 = vadd.f32 0.0, %v520
        %522 = vmatmul.f32.gmra.mxu0 %v341
        %v523 = vpop.f32.mrf.mxu0
        %v524 = vadd.f32 0.0, %v523
        %525 = vmatmul.f32.gmra.mxu0 %v344
        %v526 = vpop.f32.mrf.mxu0
        %v527 = vadd.f32 0.0, %v526
        %528 = vmatmul.f32.gmra.mxu0 %v347
        %v529 = vpop.f32.mrf.mxu0
        %v530 = vadd.f32 0.0, %v529
        %531 = vmatmul.f32.gmra.mxu0 %v350
        %v532 = vpop.f32.mrf.mxu0
        %v533 = vadd.f32 0.0, %v532
        %534 = vdwg.mxu0
        %v535 = vmax.f32 %v375, %v381
        %v536 = vmax.f32 %v378, %v384
        %v537 = vmax.f32 %v535, %v536
        %v538 = vrot.slane %v537, 4
        %v539 = vmax.f32 %v537, %v538
        %v540 = vrot.slane %v539, 2
        %v541 = vmax.f32 %v539, %v540
        %v542 = vrot.slane %v541, 1
        %v543 = vmax.f32 %v541, %v542
        %v544 = vmax.f32 %v464, %v470
        %v545 = vmax.f32 %v467, %v473
        %v546 = vmax.f32 %v544, %v545
        %v547 = vrot.slane %v546, 4
        %v548 = vmax.f32 %v546, %v547
        %v549 = vrot.slane %v548, 2
        %v550 = vmax.f32 %v548, %v549
        %v551 = vrot.slane %v550, 1
        %v552 = vmax.f32 %v550, %v551
        %v553 = vsub.f32 %v375, %v543
        %v554 = vsub.f32 %v464, %v552
        %v555 = vsub.f32 %v378, %v543
        %v556 = vsub.f32 %v467, %v552
        %v557 = vsub.f32 %v381, %v543
        %v558 = vsub.f32 %v470, %v552
        %v559 = vsub.f32 %v384, %v543
        %v560 = vsub.f32 %v473, %v552
        %v561 = vmul.f32 %v553, 1.442695
        %v562 = vpow.pop %v561
        %v563 = vmul.f32 %v554, 1.442695
        %v564 = vpow.pop %v563
        %v565 = vmul.f32 %v555, 1.442695
        %v566 = vpow.pop %v565
        %v567 = vmul.f32 %v556, 1.442695
        %v568 = vpow.pop %v567
        %v569 = vmul.f32 %v557, 1.442695
        %v570 = vpow.pop %v569
        %v571 = vmul.f32 %v558, 1.442695
        %v572 = vpow.pop %v571
        %v573 = vmul.f32 %v559, 1.442695
        %v574 = vpow.pop %v573
        %v575 = vmul.f32 %v560, 1.442695
        %v576 = vpow.pop %v575
        %v577 = vadd.f32 %v562, %v566
        %v578 = vadd.f32 %v577, %v570
        %v579 = vadd.f32 %v578, %v574
        %v580 = vrot.slane %v579, 4
        %v581 = vadd.f32 %v579, %v580
        %v582 = vrot.slane %v581, 2
        %v583 = vadd.f32 %v581, %v582
        %v584 = vrot.slane %v583, 1
        %v585 = vadd.f32 %v583, %v584
        %v586 = vadd.f32 %v564, %v568
        %v587 = vadd.f32 %v586, %v572
        %v588 = vadd.f32 %v587, %v576
        %v589 = vrot.slane %v588, 4
        %v590 = vadd.f32 %v588, %v589
        %v591 = vrot.slane %v590, 2
        %v592 = vadd.f32 %v590, %v591
        %v593 = vrot.slane %v592, 1
        %v594 = vadd.f32 %v592, %v593
        %v595 = vrcp.pop %v585
        %v596 = vrcp.pop %v594
        %v597 = vmul.f32 %v562, %v595
        %v598 = vmul.f32 %v564, %v596
        %v599 = vmul.f32 %v566, %v595
        %v600 = vmul.f32 %v568, %v596
        %v601 = vmul.f32 %v570, %v595
        %v602 = vmul.f32 %v572, %v596
        %v603 = vmul.f32 %v574, %v595
        %v604 = vmul.f32 %v576, %v596
        %v605 = vmax.f32 %v399, %v488
        %606 = vmax.xlane.f32.xlu0 %v605
        %v607 = vpop.xlane.xlu0 %606
        %v608 = vmax.f32 %v402, %v491
        %609 = vmax.xlane.f32.xlu0 %v608
        %v610 = vpop.xlane.xlu0 %609
        %v611 = vmax.f32 %v405, %v494
        %612 = vmax.xlane.f32.xlu0 %v611
        %v613 = vpop.xlane.xlu0 %612
        %v614 = vmax.f32 %v408, %v497
        %615 = vmax.xlane.f32.xlu0 %v614
        %v616 = vpop.xlane.xlu0 %615
        %v617 = vsub.f32 %v399, %v607
        %v618 = vsub.f32 %v488, %v607
        %v619 = vsub.f32 %v402, %v610
        %v620 = vsub.f32 %v491, %v610
        %v621 = vsub.f32 %v405, %v613
        %v622 = vsub.f32 %v494, %v613
        %v623 = vsub.f32 %v408, %v616
        %v624 = vsub.f32 %v497, %v616
        %v625 = vmul.f32 %v617, 1.442695
        %v626 = vpow.pop %v625
        %v627 = vmul.f32 %v618, 1.442695
        %v628 = vpow.pop %v627
        %v629 = vmul.f32 %v619, 1.442695
        %v630 = vpow.pop %v629
        %v631 = vmul.f32 %v620, 1.442695
        %v632 = vpow.pop %v631
        %v633 = vmul.f32 %v621, 1.442695
        %v634 = vpow.pop %v633
        %v635 = vmul.f32 %v622, 1.442695
        %v636 = vpow.pop %v635
        %v637 = vmul.f32 %v623, 1.442695
        %v638 = vpow.pop %v637
        %v639 = vmul.f32 %v624, 1.442695
        %v640 = vpow.pop %v639
        %v641 = vadd.f32 %v626, %v628
        %642 = vadd.xlane.f32.xlu0 %v641
        %v643 = vpop.xlane.xlu0 %642
        %v644 = vadd.f32 %v630, %v632
        %645 = vadd.xlane.f32.xlu0 %v644
        %v646 = vpop.xlane.xlu0 %645
        %v647 = vadd.f32 %v634, %v636
        %648 = vadd.xlane.f32.xlu0 %v647
        %v649 = vpop.xlane.xlu0 %648
        %v650 = vadd.f32 %v638, %v640
        %651 = vadd.xlane.f32.xlu0 %v650
        %v652 = vpop.xlane.xlu0 %651
        %v653 = vrcp.pop %v643
        %v654 = vrcp.pop %v646
        %v655 = vrcp.pop %v649
        %v656 = vrcp.pop %v652
        %v657 = vmul.f32 %v626, %v653
        %v658 = vmul.f32 %v628, %v653
        %v659 = vmul.f32 %v630, %v654
        %v660 = vmul.f32 %v632, %v654
        %v661 = vmul.f32 %v634, %v655
        %v662 = vmul.f32 %v636, %v655
        %v663 = vmul.f32 %v638, %v656
        %v664 = vmul.f32 %v640, %v656
        %665 = vmatpush.xpose.msra.mxu0 0.0
        %666 = vmatpush.xpose.msra.mxu0 0.0
        %667 = vmatpush.xpose.msra.mxu0 0.0
        %668 = vmatpush.xpose.msra.mxu0 0.0
        %669 = vmatpush.xpose.msra.mxu0 0.0
        %670 = vmatpush.xpose.msra.mxu0 0.0
        %671 = vmatpush.xpose.msra.mxu0 0.0
        %672 = vmatpush.xpose.msra.mxu0 0.0
        %673 = vmatpush.xpose.msra.mxu0 0.0
        %674 = vmatpush.xpose.msra.mxu0 0.0
        %675 = vmatpush.xpose.msra.mxu0 0.0
        %676 = vmatpush.xpose.msra.mxu0 0.0
        %677 = vmatpush.xpose.msra.mxu0 %v663
        %678 = vmatpush.xpose.msra.mxu0 %v661
        %679 = vmatpush.xpose.msra.mxu0 %v659
        %680 = vmatpush.xpose.msra.mxu0 %v657
        %681 = vmatmul.f32.gmra.mxu0 %v423
        %v682 = vpop.f32.mrf.mxu0
        %v683 = vadd.f32 0.0, %v682
        %684 = vmatmul.f32.gmra.mxu0 %v426
        %v685 = vpop.f32.mrf.mxu0
        %v686 = vadd.f32 0.0, %v685
        %687 = vmatmul.f32.gmra.mxu0 %v429
        %v688 = vpop.f32.mrf.mxu0
        %v689 = vadd.f32 0.0, %v688
        %690 = vmatmul.f32.gmra.mxu0 %v432
        %v691 = vpop.f32.mrf.mxu0
        %v692 = vadd.f32 0.0, %v691
        %693 = vdwg.mxu0
        %694 = vmatpush.xpose.msra.mxu0 0.0
        %695 = vmatpush.xpose.msra.mxu0 0.0
        %696 = vmatpush.xpose.msra.mxu0 0.0
        %697 = vmatpush.xpose.msra.mxu0 0.0
        %698 = vmatpush.xpose.msra.mxu0 0.0
        %699 = vmatpush.xpose.msra.mxu0 0.0
        %700 = vmatpush.xpose.msra.mxu0 0.0
        %701 = vmatpush.xpose.msra.mxu0 0.0
        %702 = vmatpush.xpose.msra.mxu0 0.0
        %703 = vmatpush.xpose.msra.mxu0 0.0
        %704 = vmatpush.xpose.msra.mxu0 0.0
        %705 = vmatpush.xpose.msra.mxu0 0.0
        %706 = vmatpush.xpose.msra.mxu0 %v664
        %707 = vmatpush.xpose.msra.mxu0 %v662
        %708 = vmatpush.xpose.msra.mxu0 %v660
        %709 = vmatpush.xpose.msra.mxu0 %v658
        %710 = vmatmul.f32.gmra.mxu0 %v512
        %v711 = vpop.f32.mrf.mxu0
        %v712 = vadd.f32 %v683, %v711
        %713 = vmatmul.f32.gmra.mxu0 %v515
        %v714 = vpop.f32.mrf.mxu0
        %v715 = vadd.f32 %v686, %v714
        %716 = vmatmul.f32.gmra.mxu0 %v518
        %v717 = vpop.f32.mrf.mxu0
        %v718 = vadd.f32 %v689, %v717
        %719 = vmatmul.f32.gmra.mxu0 %v521
        %v720 = vpop.f32.mrf.mxu0
        %v721 = vadd.f32 %v692, %v720
        %722 = vdwg.mxu0
        %v723 = vmul.f32 %v712, 0.17677669
        %v724 = vmul.f32 %v715, 0.17677669
        %v725 = vmul.f32 %v718, 0.17677669
        %v726 = vmul.f32 %v721, 0.17677669
        %vm727 = vcmask 261120
        %v729 = vsel %vm727, %v723, 0
        %v732 = vsel %vm727, %v724, 0
        %v735 = vsel %vm727, %v725, 0
        %v738 = vsel %vm727, %v726, 0
        %740 = vmatpush.msra.mxu0 0.0
        %741 = vmatpush.msra.mxu0 0.0
        %742 = vmatpush.msra.mxu0 0.0
        %743 = vmatpush.msra.mxu0 0.0
        %744 = vmatpush.msra.mxu0 0.0
        %745 = vmatpush.msra.mxu0 0.0
        %746 = vmatpush.msra.mxu0 0.0
        %747 = vmatpush.msra.mxu0 0.0
        %748 = vmatpush.msra.mxu0 0.0
        %749 = vmatpush.msra.mxu0 0.0
        %750 = vmatpush.msra.mxu0 0.0
        %751 = vmatpush.msra.mxu0 0.0
        %752 = vmatpush.msra.mxu0 %v603
        %753 = vmatpush.msra.mxu0 %v601
        %754 = vmatpush.msra.mxu0 %v599
        %755 = vmatpush.msra.mxu0 %v597
        %756 = vmatmul.f32.gmra.mxu0 %v729
        %v757 = vpop.f32.mrf.mxu0
        %v758 = vadd.f32 0.0, %v757
        %759 = vmatmul.f32.gmra.mxu0 %v732
        %v760 = vpop.f32.mrf.mxu0
        %v761 = vadd.f32 0.0, %v760
        %762 = vmatmul.f32.gmra.mxu0 %v735
        %v763 = vpop.f32.mrf.mxu0
        %v764 = vadd.f32 0.0, %v763
        %765 = vmatmul.f32.gmra.mxu0 %v738
        %v766 = vpop.f32.mrf.mxu0
        %v767 = vadd.f32 0.0, %v766
        %768 = vdwg.mxu0
        %769 = vmatpush.msra.mxu0 0.0
        %770 = vmatpush.msra.mxu0 0.0
        %771 = vmatpush.msra.mxu0 0.0
        %772 = vmatpush.msra.mxu0 0.0
        %773 = vmatpush.msra.mxu0 0.0
        %774 = vmatpush.msra.mxu0 0.0
        %775 = vmatpush.msra.mxu0 0.0
        %776 = vmatpush.msra.mxu0 0.0
        %777 = vmatpush.msra.mxu0 0.0
        %778 = vmatpush.msra.mxu0 0.0
        %779 = vmatpush.msra.mxu0 0.0
        %780 = vmatpush.msra.mxu0 0.0
        %781 = vmatpush.msra.mxu0 %v604
        %782 = vmatpush.msra.mxu0 %v602
        %783 = vmatpush.msra.mxu0 %v600
        %784 = vmatpush.msra.mxu0 %v598
        %785 = vmatmul.f32.gmra.mxu0 %v729
        %v786 = vpop.f32.mrf.mxu0
        %v787 = vadd.f32 0.0, %v786
        %788 = vmatmul.f32.gmra.mxu0 %v732
        %v789 = vpop.f32.mrf.mxu0
        %v790 = vadd.f32 0.0, %v789
        %791 = vmatmul.f32.gmra.mxu0 %v735
        %v792 = vpop.f32.mrf.mxu0
        %v793 = vadd.f32 0.0, %v792
        %794 = vmatmul.f32.gmra.mxu0 %v738
        %v795 = vpop.f32.mrf.mxu0
        %v796 = vadd.f32 0.0, %v795
        %797 = vdwg.mxu0
        %v798 = vmax.f32 %v387, %v393
        %v799 = vmax.f32 %v390, %v396
        %v800 = vmax.f32 %v798, %v799
        %v801 = vrot.slane %v800, 4
        %v802 = vmax.f32 %v800, %v801
        %v803 = vrot.slane %v802, 2
        %v804 = vmax.f32 %v802, %v803
        %v805 = vrot.slane %v804, 1
        %v806 = vmax.f32 %v804, %v805
        %v807 = vmax.f32 %v476, %v482
        %v808 = vmax.f32 %v479, %v485
        %v809 = vmax.f32 %v807, %v808
        %v810 = vrot.slane %v809, 4
        %v811 = vmax.f32 %v809, %v810
        %v812 = vrot.slane %v811, 2
        %v813 = vmax.f32 %v811, %v812
        %v814 = vrot.slane %v813, 1
        %v815 = vmax.f32 %v813, %v814
        %v816 = vsub.f32 %v387, %v806
        %v817 = vsub.f32 %v476, %v815
        %v818 = vsub.f32 %v390, %v806
        %v819 = vsub.f32 %v479, %v815
        %v820 = vsub.f32 %v393, %v806
        %v821 = vsub.f32 %v482, %v815
        %v822 = vsub.f32 %v396, %v806
        %v823 = vsub.f32 %v485, %v815
        %v824 = vmul.f32 %v816, 1.442695
        %v825 = vpow.pop %v824
        %v826 = vmul.f32 %v817, 1.442695
        %v827 = vpow.pop %v826
        %v828 = vmul.f32 %v818, 1.442695
        %v829 = vpow.pop %v828
        %v830 = vmul.f32 %v819, 1.442695
        %v831 = vpow.pop %v830
        %v832 = vmul.f32 %v820, 1.442695
        %v833 = vpow.pop %v832
        %v834 = vmul.f32 %v821, 1.442695
        %v835 = vpow.pop %v834
        %v836 = vmul.f32 %v822, 1.442695
        %v837 = vpow.pop %v836
        %v838 = vmul.f32 %v823, 1.442695
        %v839 = vpow.pop %v838
        %v840 = vadd.f32 %v825, %v829
        %v841 = vadd.f32 %v840, %v833
        %v842 = vadd.f32 %v841, %v837
        %v843 = vrot.slane %v842, 4
        %v844 = vadd.f32 %v842, %v843
        %v845 = vrot.slane %v844, 2
        %v846 = vadd.f32 %v844, %v845
        %v847 = vrot.slane %v846, 1
        %v848 = vadd.f32 %v846, %v847
        %v849 = vadd.f32 %v827, %v831
        %v850 = vadd.f32 %v849, %v835
        %v851 = vadd.f32 %v850, %v839
        %v852 = vrot.slane %v851, 4
        %v853 = vadd.f32 %v851, %v852
        %v854 = vrot.slane %v853, 2
        %v855 = vadd.f32 %v853, %v854
        %v856 = vrot.slane %v855, 1
        %v857 = vadd.f32 %v855, %v856
        %v858 = vrcp.pop %v848
        %v859 = vrcp.pop %v857
        %v860 = vmul.f32 %v825, %v858
        %v861 = vmul.f32 %v827, %v859
        %v862 = vmul.f32 %v829, %v858
        %v863 = vmul.f32 %v831, %v859
        %v864 = vmul.f32 %v833, %v858
        %v865 = vmul.f32 %v835, %v859
        %v866 = vmul.f32 %v837, %v858
        %v867 = vmul.f32 %v839, %v859
        %v868 = vmax.f32 %v411, %v500
        %869 = vmax.xlane.f32.xlu0 %v868
        %v870 = vpop.xlane.xlu0 %869
        %v871 = vmax.f32 %v414, %v503
        %872 = vmax.xlane.f32.xlu0 %v871
        %v873 = vpop.xlane.xlu0 %872
        %v874 = vmax.f32 %v417, %v506
        %875 = vmax.xlane.f32.xlu0 %v874
        %v876 = vpop.xlane.xlu0 %875
        %v877 = vmax.f32 %v420, %v509
        %878 = vmax.xlane.f32.xlu0 %v877
        %v879 = vpop.xlane.xlu0 %878
        %v880 = vsub.f32 %v411, %v870
        %v881 = vsub.f32 %v500, %v870
        %v882 = vsub.f32 %v414, %v873
        %v883 = vsub.f32 %v503, %v873
        %v884 = vsub.f32 %v417, %v876
        %v885 = vsub.f32 %v506, %v876
        %v886 = vsub.f32 %v420, %v879
        %v887 = vsub.f32 %v509, %v879
        %v888 = vmul.f32 %v880, 1.442695
        %v889 = vpow.pop %v888
        %v890 = vmul.f32 %v881, 1.442695
        %v891 = vpow.pop %v890
        %v892 = vmul.f32 %v882, 1.442695
        %v893 = vpow.pop %v892
        %v894 = vmul.f32 %v883, 1.442695
        %v895 = vpow.pop %v894
        %v896 = vmul.f32 %v884, 1.442695
        %v897 = vpow.pop %v896
        %v898 = vmul.f32 %v885, 1.442695
        %v899 = vpow.pop %v898
        %v900 = vmul.f32 %v886, 1.442695
        %v901 = vpow.pop %v900
        %v902 = vmul.f32 %v887, 1.442695
        %v903 = vpow.pop %v902
        %v904 = vadd.f32 %v889, %v891
        %905 = vadd.xlane.f32.xlu0 %v904
        %v906 = vpop.xlane.xlu0 %905
        %v907 = vadd.f32 %v893, %v895
        %908 = vadd.xlane.f32.xlu0 %v907
        %v909 = vpop.xlane.xlu0 %908
        %v910 = vadd.f32 %v897, %v899
        %911 = vadd.xlane.f32.xlu0 %v910
        %v912 = vpop.xlane.xlu0 %911
        %v913 = vadd.f32 %v901, %v903
        %914 = vadd.xlane.f32.xlu0 %v913
        %v915 = vpop.xlane.xlu0 %914
        %v916 = vrcp.pop %v906
        %v917 = vrcp.pop %v909
        %v918 = vrcp.pop %v912
        %v919 = vrcp.pop %v915
        %v920 = vmul.f32 %v889, %v916
        %v921 = vmul.f32 %v891, %v916
        %v922 = vmul.f32 %v893, %v917
        %v923 = vmul.f32 %v895, %v917
        %v924 = vmul.f32 %v897, %v918
        %v925 = vmul.f32 %v899, %v918
        %v926 = vmul.f32 %v901, %v919
        %v927 = vmul.f32 %v903, %v919
        %928 = vmatpush.xpose.msra.mxu0 0.0
        %929 = vmatpush.xpose.msra.mxu0 0.0
        %930 = vmatpush.xpose.msra.mxu0 0.0
        %931 = vmatpush.xpose.msra.mxu0 0.0
        %932 = vmatpush.xpose.msra.mxu0 0.0
        %933 = vmatpush.xpose.msra.mxu0 0.0
        %934 = vmatpush.xpose.msra.mxu0 0.0
        %935 = vmatpush.xpose.msra.mxu0 0.0
        %936 = vmatpush.xpose.msra.mxu0 0.0
        %937 = vmatpush.xpose.msra.mxu0 0.0
        %938 = vmatpush.xpose.msra.mxu0 0.0
        %939 = vmatpush.xpose.msra.mxu0 0.0
        %940 = vmatpush.xpose.msra.mxu0 %v926
        %941 = vmatpush.xpose.msra.mxu0 %v924
        %942 = vmatpush.xpose.msra.mxu0 %v922
        %943 = vmatpush.xpose.msra.mxu0 %v920
        %944 = vmatmul.f32.gmra.mxu0 %v435
        %v945 = vpop.f32.mrf.mxu0
        %v946 = vadd.f32 0.0, %v945
        %947 = vmatmul.f32.gmra.mxu0 %v438
        %v948 = vpop.f32.mrf.mxu0
        %v949 = vadd.f32 0.0, %v948
        %950 = vmatmul.f32.gmra.mxu0 %v441
        %v951 = vpop.f32.mrf.mxu0
        %v952 = vadd.f32 0.0, %v951
        %953 = vmatmul.f32.gmra.mxu0 %v444
        %v954 = vpop.f32.mrf.mxu0
        %v955 = vadd.f32 0.0, %v954
        %956 = vdwg.mxu0
        %957 = vmatpush.xpose.msra.mxu0 0.0
        %958 = vmatpush.xpose.msra.mxu0 0.0
        %959 = vmatpush.xpose.msra.mxu0 0.0
        %960 = vmatpush.xpose.msra.mxu0 0.0
        %961 = vmatpush.xpose.msra.mxu0 0.0
        %962 = vmatpush.xpose.msra.mxu0 0.0
        %963 = vmatpush.xpose.msra.mxu0 0.0
        %964 = vmatpush.xpose.msra.mxu0 0.0
        %965 = vmatpush.xpose.msra.mxu0 0.0
        %966 = vmatpush.xpose.msra.mxu0 0.0
        %967 = vmatpush.xpose.msra.mxu0 0.0
        %968 = vmatpush.xpose.msra.mxu0 0.0
        %969 = vmatpush.xpose.msra.mxu0 %v927
        %970 = vmatpush.xpose.msra.mxu0 %v925
        %971 = vmatpush.xpose.msra.mxu0 %v923
        %972 = vmatpush.xpose.msra.mxu0 %v921
        %973 = vmatmul.f32.gmra.mxu0 %v524
        %v974 = vpop.f32.mrf.mxu0
        %v975 = vadd.f32 %v946, %v974
        %976 = vmatmul.f32.gmra.mxu0 %v527
        %v977 = vpop.f32.mrf.mxu0
        %v978 = vadd.f32 %v949, %v977
        %979 = vmatmul.f32.gmra.mxu0 %v530
        %v980 = vpop.f32.mrf.mxu0
        %v981 = vadd.f32 %v952, %v980
        %982 = vmatmul.f32.gmra.mxu0 %v533
        %v983 = vpop.f32.mrf.mxu0
        %v984 = vadd.f32 %v955, %v983
        %985 = vdwg.mxu0
        %v986 = vmul.f32 %v975, 0.17677669
        %v987 = vmul.f32 %v978, 0.17677669
        %v988 = vmul.f32 %v981, 0.17677669
        %v989 = vmul.f32 %v984, 0.17677669
        %v991 = vsel %vm727, %v986, 0
        %v994 = vsel %vm727, %v987, 0
        %v997 = vsel %vm727, %v988, 0
        %v1000 = vsel %vm727, %v989, 0
        %1002 = vmatpush.msra.mxu0 0.0
        %1003 = vmatpush.msra.mxu0 0.0
        %1004 = vmatpush.msra.mxu0 0.0
        %1005 = vmatpush.msra.mxu0 0.0
        %1006 = vmatpush.msra.mxu0 0.0
        %1007 = vmatpush.msra.mxu0 0.0
        %1008 = vmatpush.msra.mxu0 0.0
        %1009 = vmatpush.msra.mxu0 0.0
        %1010 = vmatpush.msra.mxu0 0.0
        %1011 = vmatpush.msra.mxu0 0.0
        %1012 = vmatpush.msra.mxu0 0.0
        %1013 = vmatpush.msra.mxu0 0.0
        %1014 = vmatpush.msra.mxu0 %v866
        %1015 = vmatpush.msra.mxu0 %v864
        %1016 = vmatpush.msra.mxu0 %v862
        %1017 = vmatpush.msra.mxu0 %v860
        %1018 = vmatmul.f32.gmra.mxu0 %v991
        %v1019 = vpop.f32.mrf.mxu0
        %v1020 = vadd.f32 0.0, %v1019
        %1021 = vmatmul.f32.gmra.mxu0 %v994
        %v1022 = vpop.f32.mrf.mxu0
        %v1023 = vadd.f32 0.0, %v1022
        %1024 = vmatmul.f32.gmra.mxu0 %v997
        %v1025 = vpop.f32.mrf.mxu0
        %v1026 = vadd.f32 0.0, %v1025
        %1027 = vmatmul.f32.gmra.mxu0 %v1000
        %v1028 = vpop.f32.mrf.mxu0
        %v1029 = vadd.f32 0.0, %v1028
        %1030 = vdwg.mxu0
        %1031 = vmatpush.msra.mxu0 0.0
        %1032 = vmatpush.msra.mxu0 0.0
        %1033 = vmatpush.msra.mxu0 0.0
        %1034 = vmatpush.msra.mxu0 0.0
        %1035 = vmatpush.msra.mxu0 0.0
        %1036 = vmatpush.msra.mxu0 0.0
        %1037 = vmatpush.msra.mxu0 0.0
        %1038 = vmatpush.msra.mxu0 0.0
        %1039 = vmatpush.msra.mxu0 0.0
        %1040 = vmatpush.msra.mxu0 0.0
        %1041 = vmatpush.msra.mxu0 0.0
        %1042 = vmatpush.msra.mxu0 0.0
        %1043 = vmatpush.msra.mxu0 %v867
        %1044 = vmatpush.msra.mxu0 %v865
        %1045 = vmatpush.msra.mxu0 %v863
        %1046 = vmatpush.msra.mxu0 %v861
        %1047 = vmatmul.f32.gmra.mxu0 %v991
        %v1048 = vpop.f32.mrf.mxu0
        %v1049 = vadd.f32 0.0, %v1048
        %1050 = vmatmul.f32.gmra.mxu0 %v994
        %v1051 = vpop.f32.mrf.mxu0
        %v1052 = vadd.f32 0.0, %v1051
        %1053 = vmatmul.f32.gmra.mxu0 %v997
        %v1054 = vpop.f32.mrf.mxu0
        %v1055 = vadd.f32 0.0, %v1054
        %1056 = vmatmul.f32.gmra.mxu0 %v1000
        %v1057 = vpop.f32.mrf.mxu0
        %v1058 = vadd.f32 0.0, %v1057
        %1059 = vdwg.mxu0
        %v1060 = vld [vmem:[%s2] sm:$0xf]
        %v1061 = vld [vmem:[%s3] sm:$0xf]
        %1063 = vset.pattern.permute.xlu0 0
        %1064 = vperm.xlu0 %1063, %v1061
        %v1065 = vpop.permute.xlu0 %1064
        %vm1067 = vcmask 523264
        %v1069 = vsel %vm1067, %v1060, 0
        %1071 = vmatpush.msra.mxu0 0.0
        %1072 = vmatpush.msra.mxu0 0.0
        %1073 = vmatpush.msra.mxu0 0.0
        %1074 = vmatpush.msra.mxu0 0.0
        %1075 = vmatpush.msra.mxu0 0.0
        %1076 = vmatpush.msra.mxu0 0.0
        %1077 = vmatpush.msra.mxu0 0.0
        %1078 = vmatpush.msra.mxu0 0.0
        %1079 = vmatpush.msra.mxu0 %v1029
        %1080 = vmatpush.msra.mxu0 %v1026
        %1081 = vmatpush.msra.mxu0 %v1023
        %1082 = vmatpush.msra.mxu0 %v1020
        %1083 = vmatpush.msra.mxu0 %v767
        %1084 = vmatpush.msra.mxu0 %v764
        %1085 = vmatpush.msra.mxu0 %v761
        %1086 = vmatpush.msra.mxu0 %v758
        %1087 = vmatmul.f32.gmra.mxu0 %v1069
        %v1088 = vpop.f32.mrf.mxu0
        %v1089 = vadd.f32 %v1065, %v1088
        %1090 = vdwg.mxu0
        %1091 = vmatpush.msra.mxu0 0.0
        %1092 = vmatpush.msra.mxu0 0.0
        %1093 = vmatpush.msra.mxu0 0.0
        %1094 = vmatpush.msra.mxu0 0.0
        %1095 = vmatpush.msra.mxu0 0.0
        %1096 = vmatpush.msra.mxu0 0.0
        %1097 = vmatpush.msra.mxu0 0.0
        %1098 = vmatpush.msra.mxu0 0.0
        %1099 = vmatpush.msra.mxu0 %v1058
        %1100 = vmatpush.msra.mxu0 %v1055
        %1101 = vmatpush.msra.mxu0 %v1052
        %1102 = vmatpush.msra.mxu0 %v1049
        %1103 = vmatpush.msra.mxu0 %v796
        %1104 = vmatpush.msra.mxu0 %v793
        %1105 = vmatpush.msra.mxu0 %v790
        %1106 = vmatpush.msra.mxu0 %v787
        %1107 = vmatmul.f32.gmra.mxu0 %v1069
        %v1108 = vpop.f32.mrf.mxu0
        %v1109 = vadd.f32 %v1065, %v1108
        %1110 = vdwg.mxu0
        %v1111 = vsel %vm352, %v1089, 0.0
        %v1112 = vsel %vm352, %v1109, 0.0
        %v1113 = vadd.f32 %v1111, %v1112
        %1114 = vadd.xlane.f32.xlu0 %v1113
        %v1115 = vpop.xlane.xlu0 %1114
        %v1116 = vrot.slane %v1115, 4
        %v1117 = vadd.f32 %v1115, %v1116
        %v1118 = vrot.slane %v1117, 2
        %v1119 = vadd.f32 %v1117, %v1118
        %v1120 = vrot.slane %v1119, 1
        %v1121 = vadd.f32 %v1119, %v1120
        %s1122 = vtos %v1121
        %v1123 = vstv %s1122
        %v1124 = vrcp.pop 1024.0
        %v1125 = vmul.f32 1024.0, %v1124
        %v1126 = vsub.f32 1.0, %v1125
        %v1127 = vmul.f32 %v1124, %v1126
        %v1128 = vadd.f32 %v1124, %v1127
        %vm1129 = vweird.f32 %v1124
        %v1130 = vsel %vm1129, %v1124, %v1128
        %v1131 = vmul.f32 %v1123, %v1130
        %v1132 = vsub.f32 %v1089, %v1131
        %v1133 = vsub.f32 %v1109, %v1131
        %v1134 = vmul.f32 %v1132, %v1132
        %v1135 = vmul.f32 %v1133, %v1133
        %v1136 = vsel %vm352, %v1134, 0.0
        %v1137 = vsel %vm352, %v1135, 0.0
        %v1138 = vadd.f32 %v1136, %v1137
        %1139 = vadd.xlane.f32.xlu0 %v1138
        %v1140 = vpop.xlane.xlu0 %1139
        %v1141 = vrot.slane %v1140, 4
        %v1142 = vadd.f32 %v1140, %v1141
        %v1143 = vrot.slane %v1142, 2
        %v1144 = vadd.f32 %v1142, %v1143
        %v1145 = vrot.slane %v1144, 1
        %v1146 = vadd.f32 %v1144, %v1145
        %s1147 = vtos %v1146
        %v1148 = vstv %s1147
        %v1149 = vmul.f32 %v1148, %v1130
        %v1150 = vadd.f32 %v1149, 1e-05
        %v1151 = vrsqrt.pop %v1150
        %v1152 = vmul.f32 %v1151, %v1150
        %v1153 = vmul.f32 %v1152, %v1151
        %v1154 = vmul.f32 0.5, %v1153
        %v1155 = vsub.f32 1.5, %v1154
        %v1156 = vmul.f32 %v1151, %v1155
        %vm1157 = vweird.f32 %v1150
        %vm1158 = vweird.f32 %v1151
        %vm1159 = vmor %vm1157, %vm1158
        %v1160 = vsel %vm1159, %v1151, %v1156
        %v1161 = vmul.f32 %v1132, %v1160
        %v1162 = vmul.f32 %v1133, %v1160
        %v1163 = vld [vmem:[%s4] sm:$0xf]
        %1165 = vset.pattern.permute.xlu0 0
        %1166 = vperm.xlu0 %1165, %v1163
        %v1167 = vpop.permute.xlu0 %1166
        %v1169 = vmul.f32 %v1161, %v1167
        %v1170 = vmul.f32 %v1162, %v1167
        %v1171 = vld [vmem:[%s5] sm:$0xf]
        %1173 = vset.pattern.permute.xlu0 0
        %1174 = vperm.xlu0 %1173, %v1171
        %v1175 = vpop.permute.xlu0 %1174
        %v1177 = vadd.f32 %v1169, %v1175
        %v1178 = vadd.f32 %v1170, %v1175
        %v1181 = vrot.slane %v1178, 4
        %v1182 = vsel %vm352, %v1177, %v1181
        %1184 = vst [vmem:[%s244] sm:$0xff] %v1182
        %s1185 = sand.u32 %s159, 1
        %s1186 = scalar_lea.sflag [#allocation3], %s1185
        %s1187 = sand.u32 %s159, 1
        %s1188 = smul.addr %s1187, 8
        %s1189 = scalar_lea.vmem [#allocation2], %s1188
        // Predicated region
        $region45: #{tpu_custom_call.1} parent=43 // pred_check
          %p1190 = pneg %p169
        $region46: #{tpu_custom_call.1} parent=43 // pred_check_branch
          %1192 = sbr.rel (%p1190) target = $region48
        $region47: #{tpu_custom_call.1} parent=43 // pred_region
          %1194 = vsyncadd %s1186, 0
          %s1195 = smul.addr %s20, 2
          %s1196 = smul.addr %s1195, 4
          %s1197 = scalar_lea.hbm %s6, %s1196
          %s1199 = sshll.u32 %s1189, 4
          %s1200 = int_to_ptr.vmem [resolvable:$true] %s1199
          %s1201 = sshll.u32 %s1197, 4
          %s1202 = int_to_ptr.hbm [resolvable:$true] %s1201
          %1204 = dma.vmem_to_hbm [thread:$0]  %s1200, 128, %s1202, %s1186
        $region48: #{tpu_custom_call.1} parent=43 // pred_fallthru
          _
      $region44: #{tpu_custom_call.1} parent=5 // pred_fallthru
        _
      %p1205 = scmp.le.s32.totalorder 2, %s15
      // Predicated region
      $region49: #{tpu_custom_call.1} parent=5 // pred_check
        %p1206 = pneg %p1205
      $region50: #{tpu_custom_call.1} parent=5 // pred_check_branch
        %1208 = sbr.rel (%p1206) target = $region52
      $region51: #{tpu_custom_call.1} parent=5 // pred_region
        %s1209 = ssub.s32 %s15, 2
        // Predicated region
        $region53: #{tpu_custom_call.1} parent=51 // pred_check
          %p1210 = pneg %p175
        $region54: #{tpu_custom_call.1} parent=51 // pred_check_branch
          %1212 = sbr.rel (%p1210) target = $region56
        $region55: #{tpu_custom_call.1} parent=51 // pred_region
          %s1213 = sand.u32 %s160, 1
          %s1214 = scalar_lea.sflag [#allocation3], %s1213
          %s1215 = sand.u32 %s160, 1
          %s1216 = smul.addr %s1215, 8
          %s1217 = scalar_lea.vmem [#allocation2], %s1216
          %1219 = dma.done %s1214, 128
        $region56: #{tpu_custom_call.1} parent=51 // pred_fallthru
          _
      $region52: #{tpu_custom_call.1} parent=5 // pred_fallthru
        _
    $region6: #{tpu_custom_call.1} parent=1 // loop_footer
      %s19 = sadd.s32 1, %s15
    $region7: #{tpu_custom_call.1} parent=1 // loop_footer_branch
      %14 = sbr.rel target = $region3
    $region8: #{tpu_custom_call.1} parent=1 // loop_exit
      _
    %1220 = vsyncpa [#allocation3], 1
    %s1221 = scalar_lea.sflag [#allocation3], 1
    %1222 = vsyncpa %s1221, 1

</llo_original>
